<compile_context>
chip_gen: v7x
topology: tpu7x:2x2x1
jax: 0.10.0
libtpu: 0.0.40
codegen_flags: <defaults>
</compile_context>

<pallas_src>
import functools

import jax
import jax.numpy as jnp
from jax.experimental import pallas as pl
from jax.experimental.pallas import tpu as pltpu

IN_DIM = 200
HID_DIM = 100


def _round_up(n, m):
    return ((n + m - 1) // m) * m


def _mlp_kernel(x_ref, w1_ref, b1_ref, w2_ref, b2_ref, w3_ref, b3_ref, o_ref):
    # x tile arrives straight from HBM as f32 (no wrapper pad/cast pass);
    # cast to bf16 here for the MXU.  All dots accumulate in f32.
    x = x_ref[...].astype(jnp.bfloat16)
    # Layer 1: Linear(200 -> 128 padded) + ReLU
    h = jnp.dot(x, w1_ref[...], preferred_element_type=jnp.float32)
    h = jnp.maximum(h + b1_ref[...], 0.0)
    # Layer 2: Linear(128 -> 128 padded) + ReLU
    h = jnp.dot(h.astype(jnp.bfloat16), w2_ref[...],
                preferred_element_type=jnp.float32)
    h = jnp.maximum(h + b2_ref[...], 0.0)
    # Layer 3: Linear(128 -> k padded), no activation
    out = jnp.dot(h.astype(jnp.bfloat16), w3_ref[...],
                  preferred_element_type=jnp.float32)
    out = out + b3_ref[...]
    # Lane-dense (128-wide) bf16 store -> unmasked vst.
    o_ref[...] = out.astype(o_ref.dtype)


def _pad2(a, shape, dtype):
    """Zero-pad a 2-D array up to `shape` and cast to `dtype`."""
    out = jnp.zeros(shape, dtype)
    return out.at[: a.shape[0], : a.shape[1]].set(a.astype(dtype))


def prepare_params(params):
    """One-time pad + cast of the (tiny, ~100 KiB) weights and biases.

    Call once at init and reuse the result for every forward pass so that the
    per-call work is exactly one pallas_call (review item: hoist the pad/cast
    ops out of the latency path).  Zero padding is exact: padded weight
    rows/cols and bias lanes are 0, so padded lanes stay 0 through dot+ReLU.
    Note: w1 keeps its contraction dim at 200 (x is passed unpadded).
    """
    k = params["w3"].shape[1]
    hid_p = _round_up(HID_DIM, 128)   # 128
    k_p = _round_up(k, 128)           # lane-dense output width (>= 128)
    prepped = dict(
        w1=_pad2(params["w1"], (IN_DIM, hid_p), jnp.bfloat16),
        b1=_pad2(params["b1"], (1, hid_p), jnp.float32),
        w2=_pad2(params["w2"], (hid_p, hid_p), jnp.bfloat16),
        b2=_pad2(params["b2"], (1, hid_p), jnp.float32),
        w3=_pad2(params["w3"], (hid_p, k_p), jnp.bfloat16),
        b3=_pad2(params["b3"], (1, k_p), jnp.float32),
    )
    return prepped, k


def non_ar_net_forward(x, prepped, *, k, max_batch_tile=2048):
    """Non_AR_net forward as a single Pallas kernel.

    x: (B, 200) float32 (unpadded, uncast)
    prepped: output of prepare_params (padded bf16 weights / f32 biases)
    Returns (B, k) float32.
    """
    B, d_in = x.shape
    assert d_in == IN_DIM
    hid_p = prepped["w1"].shape[1]
    k_p = prepped["w3"].shape[1]

    # ---- adaptive batch tiling ----
    if B < 64:
        # Tiny-batch latency path: one grid step, whole batch as one block
        # (block dims equal to the full array dims are always legal).
        tb = B
        grid = (1,)
    else:
        # >= 2 tiles so the "parallel" grid axis can shard over both
        # TensorCores on v7x; large B uses up to `max_batch_tile`-row tiles
        # sized adaptively so padding waste is at most one 16-row group per
        # tile (e.g. B=600 -> 2 tiles of 304 rows instead of 2x512).
        n_tiles = max(2, pl.cdiv(B, max_batch_tile))
        tb = _round_up(pl.cdiv(B, n_tiles), 16)
        grid = (pl.cdiv(B, tb),)
    # A partial trailing block is handled by Pallas boundary masking: the
    # out-of-range output rows are dropped on writeback, so no batch-padded
    # copy of x is ever materialized in HBM.

    def const_spec(shape):
        # Whole weight/bias tensors resident every step.  Their block index
        # is constant across the grid, so Pallas only DMAs them once.
        # (pl.Buffered(1) would additionally drop the second ~130 KiB buffer;
        # skipped as the win is negligible for this kernel.)
        return pl.BlockSpec(shape, lambda i: (0, 0))

    out_padded = pl.pallas_call(
        _mlp_kernel,
        out_shape=jax.ShapeDtypeStruct((B, k_p), jnp.bfloat16),
        grid_spec=pltpu.PrefetchScalarGridSpec(
            num_scalar_prefetch=0,
            grid=grid,
            in_specs=[
                pl.BlockSpec((tb, IN_DIM), lambda i: (i, 0)),   # x (f32, unpadded)
                const_spec((IN_DIM, hid_p)),                    # w1
                const_spec((1, hid_p)),                         # b1
                const_spec((hid_p, hid_p)),                     # w2
                const_spec((1, hid_p)),                         # b2
                const_spec((hid_p, k_p)),                       # w3
                const_spec((1, k_p)),                           # b3
            ],
            out_specs=pl.BlockSpec((tb, k_p), lambda i: (i, 0)),
        ),
        compiler_params=pltpu.CompilerParams(
            dimension_semantics=("parallel",),
        ),
    )(x, prepped["w1"], prepped["b1"], prepped["w2"], prepped["b2"],
      prepped["w3"], prepped["b3"])

    # Drop the padded output lanes; cast back to f32 for the caller.
    return out_padded[:, :k].astype(jnp.float32)


def init_params(key, k):
    """Deterministic init mimicking nn.Linear's U(-1/sqrt(fan_in), 1/sqrt(fan_in))."""
    keys = jax.random.split(key, 6)

    def linear(kw, kb, fan_in, fan_out):
        bound = 1.0 / jnp.sqrt(jnp.float32(fan_in))
        w = jax.random.uniform(kw, (fan_in, fan_out), jnp.float32, -bound, bound)
        b = jax.random.uniform(kb, (1, fan_out), jnp.float32, -bound, bound)
        return w, b

    w1, b1 = linear(keys[0], keys[1], IN_DIM, HID_DIM)
    w2, b2 = linear(keys[2], keys[3], HID_DIM, HID_DIM)
    w3, b3 = linear(keys[4], keys[5], HID_DIM, k)
    return dict(w1=w1, b1=b1, w2=w2, b2=b2, w3=w3, b3=b3)


def reference_forward(x, p):
    h = jnp.maximum(x @ p["w1"] + p["b1"], 0.0)
    h = jnp.maximum(h @ p["w2"] + p["b2"], 0.0)
    return h @ p["w3"] + p["b3"]


if __name__ == "__main__":
    key = jax.random.PRNGKey(0)
    k_out = 32          # Non_AR_net(k=32)

    kx, kp, kx2 = jax.random.split(key, 3)
    params = init_params(kp, k_out)

    # One-time weight prep (padding/cast hoisted out of the forward pass).
    prepped, k = prepare_params(params)
    prepped = jax.tree_util.tree_map(jax.block_until_ready, prepped)

    fwd = jax.jit(non_ar_net_forward, static_argnames=("k", "max_batch_tile"))

    # Tiny-batch latency path: single grid step, everything resident.
    batch = 8
    x = jax.random.normal(kx, (batch, IN_DIM), jnp.float32)
    out = jax.block_until_ready(fwd(x, prepped, k=k))
    ref = reference_forward(x, params)
    assert out.shape == (batch, k_out)
    # bf16 matmul operands + bf16 output store -> loosened tolerance vs f32 ref.
    assert jnp.allclose(out, ref, atol=5e-2, rtol=5e-2), \
        "mismatch vs JAX reference (small batch)"

    # Larger batch: adaptive tiling (2 tiles of 304 rows, partial last block).
    batch2 = 600
    x2 = jax.random.normal(kx2, (batch2, IN_DIM), jnp.float32)
    out2 = jax.block_until_ready(fwd(x2, prepped, k=k))
    ref2 = reference_forward(x2, params)
    assert out2.shape == (batch2, k_out)
    assert jnp.allclose(out2, ref2, atol=5e-2, rtol=5e-2), \
        "mismatch vs JAX reference (large batch)"

    print("KERNEL_OK")
</pallas_src>

<mosaic_0001>
module attributes {stable_mosaic.version = 11 : i64} {
  func.func @_mlp_kernel(%arg0: i32, %arg1: memref<8x200xf32, #tpu.memory_space<vmem>>, %arg2: memref<200x128xbf16, #tpu.memory_space<vmem>>, %arg3: memref<1x128xf32, #tpu.memory_space<vmem>>, %arg4: memref<128x128xbf16, #tpu.memory_space<vmem>>, %arg5: memref<1x128xf32, #tpu.memory_space<vmem>>, %arg6: memref<128x128xbf16, #tpu.memory_space<vmem>>, %arg7: memref<1x128xf32, #tpu.memory_space<vmem>>, %arg8: memref<8x128xbf16, #tpu.memory_space<vmem>>) attributes {dimension_semantics = [#tpu.dimension_semantics<parallel>], iteration_bounds = array<i64: 1>, scalar_prefetch = 0 : i64, scratch_operands = 0 : i64, tpu.core_type = #tpu.core_type<tc>, window_params = [{transform_indices = @transform_0, window_bounds = array<i64: 8, 200>}, {pipeline_mode = #tpu.pipeline_mode<synchronous>, transform_indices = @transform_1, window_bounds = array<i64: 200, 128>}, {pipeline_mode = #tpu.pipeline_mode<synchronous>, transform_indices = @transform_2, window_bounds = array<i64: 1, 128>}, {pipeline_mode = #tpu.pipeline_mode<synchronous>, transform_indices = @transform_3, window_bounds = array<i64: 128, 128>}, {pipeline_mode = #tpu.pipeline_mode<synchronous>, transform_indices = @transform_4, window_bounds = array<i64: 1, 128>}, {pipeline_mode = #tpu.pipeline_mode<synchronous>, transform_indices = @transform_5, window_bounds = array<i64: 128, 128>}, {pipeline_mode = #tpu.pipeline_mode<synchronous>, transform_indices = @transform_6, window_bounds = array<i64: 1, 128>}, {transform_indices = @transform_7, window_bounds = array<i64: 8, 128>}]} {
    %c0 = arith.constant 0 : index
    %c0_0 = arith.constant 0 : index
    %0 = vector.load %arg1[%c0, %c0_0] : memref<8x200xf32, #tpu.memory_space<vmem>>, vector<8x200xf32>
    %1 = arith.truncf %0 : vector<8x200xf32> to vector<8x200xbf16>
    %c0_1 = arith.constant 0 : index
    %c0_2 = arith.constant 0 : index
    %2 = vector.load %arg2[%c0_1, %c0_2] : memref<200x128xbf16, #tpu.memory_space<vmem>>, vector<200x128xbf16>
    %cst = arith.constant dense<0.000000e+00> : vector<8x128xf32>
    %3 = tpu.matmul %1, %2, %cst {dimension_numbers = #tpu.dot_dimension_numbers<[1], [0], [0], [1], [0, 0, 1, 1], [], []>} : vector<8x200xbf16>, vector<200x128xbf16>, vector<8x128xf32> -> vector<8x128xf32>
    %c0_3 = arith.constant 0 : index
    %c0_4 = arith.constant 0 : index
    %4 = vector.load %arg3[%c0_3, %c0_4] : memref<1x128xf32, #tpu.memory_space<vmem>>, vector<1x128xf32>
    %5 = vector.broadcast %4 : vector<1x128xf32> to vector<8x128xf32>
    %6 = arith.addf %3, %5 : vector<8x128xf32>
    %cst_5 = arith.constant 0.000000e+00 : f32
    %7 = vector.broadcast %cst_5 : f32 to vector<8x128xf32>
    %8 = arith.maximumf %6, %7 : vector<8x128xf32>
    %9 = arith.truncf %8 : vector<8x128xf32> to vector<8x128xbf16>
    %c0_6 = arith.constant 0 : index
    %c0_7 = arith.constant 0 : index
    %10 = vector.load %arg4[%c0_6, %c0_7] : memref<128x128xbf16, #tpu.memory_space<vmem>>, vector<128x128xbf16>
    %cst_8 = arith.constant dense<0.000000e+00> : vector<8x128xf32>
    %11 = tpu.matmul %9, %10, %cst_8 {dimension_numbers = #tpu.dot_dimension_numbers<[1], [0], [0], [1], [0, 0, 1, 1], [], []>} : vector<8x128xbf16>, vector<128x128xbf16>, vector<8x128xf32> -> vector<8x128xf32>
    %c0_9 = arith.constant 0 : index
    %c0_10 = arith.constant 0 : index
    %12 = vector.load %arg5[%c0_9, %c0_10] : memref<1x128xf32, #tpu.memory_space<vmem>>, vector<1x128xf32>
    %13 = vector.broadcast %12 : vector<1x128xf32> to vector<8x128xf32>
    %14 = arith.addf %11, %13 : vector<8x128xf32>
    %cst_11 = arith.constant 0.000000e+00 : f32
    %15 = vector.broadcast %cst_11 : f32 to vector<8x128xf32>
    %16 = arith.maximumf %14, %15 : vector<8x128xf32>
    %17 = arith.truncf %16 : vector<8x128xf32> to vector<8x128xbf16>
    %c0_12 = arith.constant 0 : index
    %c0_13 = arith.constant 0 : index
    %18 = vector.load %arg6[%c0_12, %c0_13] : memref<128x128xbf16, #tpu.memory_space<vmem>>, vector<128x128xbf16>
    %cst_14 = arith.constant dense<0.000000e+00> : vector<8x128xf32>
    %19 = tpu.matmul %17, %18, %cst_14 {dimension_numbers = #tpu.dot_dimension_numbers<[1], [0], [0], [1], [0, 0, 1, 1], [], []>} : vector<8x128xbf16>, vector<128x128xbf16>, vector<8x128xf32> -> vector<8x128xf32>
    %c0_15 = arith.constant 0 : index
    %c0_16 = arith.constant 0 : index
    %20 = vector.load %arg7[%c0_15, %c0_16] : memref<1x128xf32, #tpu.memory_space<vmem>>, vector<1x128xf32>
    %21 = vector.broadcast %20 : vector<1x128xf32> to vector<8x128xf32>
    %22 = arith.addf %19, %21 : vector<8x128xf32>
    %23 = arith.truncf %22 : vector<8x128xf32> to vector<8x128xbf16>
    %c0_17 = arith.constant 0 : index
    %c0_18 = arith.constant 0 : index
    %24 = vector.load %arg8[%c0_17, %c0_18] : memref<8x128xbf16, #tpu.memory_space<vmem>>, vector<8x128xbf16>
    tpu.vector_store %arg8[%c0_17, %c0_18], %23 {strides = array<i32>} : memref<8x128xbf16, #tpu.memory_space<vmem>>, vector<8x128xbf16>,
    return
  }
  func.func @transform_0(%arg0: i32) -> (i32, i32) {
    %c0_i32 = arith.constant 0 : i32
    %c0_i32_0 = arith.constant 0 : i32
    return %arg0, %c0_i32 : i32, i32
  }
  func.func @transform_1(%arg0: i32) -> (i32, i32) {
    %c0_i32 = arith.constant 0 : i32
    %c0_i32_0 = arith.constant 0 : i32
    %c0_i32_1 = arith.constant 0 : i32
    return %c0_i32, %c0_i32_0 : i32, i32
  }
  func.func @transform_2(%arg0: i32) -> (i32, i32) {
    %c0_i32 = arith.constant 0 : i32
    %c0_i32_0 = arith.constant 0 : i32
    %c0_i32_1 = arith.constant 0 : i32
    return %c0_i32, %c0_i32_0 : i32, i32
  }
  func.func @transform_3(%arg0: i32) -> (i32, i32) {
    %c0_i32 = arith.constant 0 : i32
    %c0_i32_0 = arith.constant 0 : i32
    %c0_i32_1 = arith.constant 0 : i32
    return %c0_i32, %c0_i32_0 : i32, i32
  }
  func.func @transform_4(%arg0: i32) -> (i32, i32) {
    %c0_i32 = arith.constant 0 : i32
    %c0_i32_0 = arith.constant 0 : i32
    %c0_i32_1 = arith.constant 0 : i32
    return %c0_i32, %c0_i32_0 : i32, i32
  }
  func.func @transform_5(%arg0: i32) -> (i32, i32) {
    %c0_i32 = arith.constant 0 : i32
    %c0_i32_0 = arith.constant 0 : i32
    %c0_i32_1 = arith.constant 0 : i32
    return %c0_i32, %c0_i32_0 : i32, i32
  }
  func.func @transform_6(%arg0: i32) -> (i32, i32) {
    %c0_i32 = arith.constant 0 : i32
    %c0_i32_0 = arith.constant 0 : i32
    %c0_i32_1 = arith.constant 0 : i32
    return %c0_i32, %c0_i32_0 : i32, i32
  }
  func.func @transform_7(%arg0: i32) -> (i32, i32) {
    %c0_i32 = arith.constant 0 : i32
    %c0_i32_0 = arith.constant 0 : i32
    return %arg0, %c0_i32 : i32, i32
  }
}

</mosaic_0001>

<llo_original>
// kernel: non_ar_net_forward.1
$region0: #{non_ar_net_forward.1}
  #allocation0 [shape = 'u32[]', space=smem, size = 0x4, offset = 0x4, fixed_abs, tag = 'smem constant byte address 0x4 - core index']
  #allocation1 [shape = 'u32[144,128]{1,0:T(1,128)}', space=vmem, size = 0x12000, scoped, tag = 'internal scratch']
  %s0 = inlined_call_operand.hbm [shape: f32[8,200], index: 0, kind: input, shape index: {}]
  %s1 = inlined_call_operand.hbm [shape: bf16[200,128], index: 1, kind: input, shape index: {}]
  %s2 = inlined_call_operand.vmem [shape: f32[1,128], index: 2, kind: input, shape index: {}]
  %s3 = inlined_call_operand.hbm [shape: bf16[128,128], index: 3, kind: input, shape index: {}]
  %s4 = inlined_call_operand.vmem [shape: f32[1,128], index: 4, kind: input, shape index: {}]
  %s5 = inlined_call_operand.hbm [shape: bf16[128,128], index: 5, kind: input, shape index: {}]
  %s6 = inlined_call_operand.vmem [shape: f32[1,128], index: 6, kind: input, shape index: {}]
  %s7 = inlined_call_operand.vmem [shape: bf16[8,128], index: 7, kind: output, shape index: {}]
  %s8 = sld [smem:[#allocation0]]
  $region54: #{non_ar_net_forward.1} parent=0
    _
  %s10 = ssub.s32 1, %s8
  %s11 = scalar_select 0, %s10, %s8
  $region1: #{non_ar_net_forward.1} parent=0
    #allocation2 [shape = 'u8[8192]{0}', space=vmem, size = 0x2000, scoped, tag = 'input window, operand 0, single buffered']
    #allocation3 [shape = 's32[1]{0}', space=sflag, size = 0x4, scoped, tag = 'scoped memory for non_ar_net_forward.1']
    #allocation4 [shape = 'u8[51200]{0}', space=vmem, size = 0xc800, scoped, tag = 'input window, operand 1, single buffered']
    #allocation5 [shape = 's32[1]{0}', space=sflag, size = 0x4, scoped, tag = 'scoped memory for non_ar_net_forward.1']
    #allocation6 [shape = 'u8[32768]{0}', space=vmem, size = 0x8000, scoped, tag = 'input window, operand 3, single buffered']
    #allocation7 [shape = 'u8[32768]{0}', space=vmem, size = 0x8000, scoped, tag = 'input window, operand 5, single buffered']
    #allocation8 [shape = 's32[1]{0}', space=sflag, size = 0x4, scoped, tag = 'scoped memory for non_ar_net_forward.1']
    %12 = vsyncpa [#allocation3], 0
    %13 = vsyncpa [#allocation5], 0
    %14 = vsyncpa [#allocation8], 0
    // Predicated region
    $region2: #{non_ar_net_forward.1} parent=1 // pred_check
      _
    $region3: #{non_ar_net_forward.1} parent=1 // pred_check_branch
      %16 = sbr.rel (0) target = $region5
    $region4: #{non_ar_net_forward.1} parent=1 // pred_region
      %s18 = ssub.s32 256, 256
      %19 = vsyncadd [#allocation3], %s18
      %s21 = sshll.u32 [#allocation2], 4
      %s22 = int_to_ptr.vmem [resolvable:$true] %s21
      %24 = dma.hbm_to_vmem [thread:$0]  %s0, 256, %s22, [#allocation3]
    $region5: #{non_ar_net_forward.1} parent=1 // pred_fallthru
      _
    // Predicated region
    $region6: #{non_ar_net_forward.1} parent=1 // pred_check
      _
    $region7: #{non_ar_net_forward.1} parent=1 // pred_check_branch
      %26 = sbr.rel (0) target = $region9
    $region8: #{non_ar_net_forward.1} parent=1 // pred_region
      %s28 = ssub.s32 1600, 1600
      %29 = vsyncadd [#allocation5], %s28
      %s30 = sshll.u32 [#allocation4], 4
      %s31 = int_to_ptr.vmem [resolvable:$true] %s30
      %36 = dma.hbm_to_vmem [thread:$0]  %s1, 1600, %s31, [#allocation5], 64, 64, 4
    $region9: #{non_ar_net_forward.1} parent=1 // pred_fallthru
      _
    // Predicated region
    $region10: #{non_ar_net_forward.1} parent=1 // pred_check
      _
    $region11: #{non_ar_net_forward.1} parent=1 // pred_check_branch
      %38 = sbr.rel (0) target = $region13
    $region12: #{non_ar_net_forward.1} parent=1 // pred_region
      _
    $region13: #{non_ar_net_forward.1} parent=1 // pred_fallthru
      _
    // Predicated region
    $region14: #{non_ar_net_forward.1} parent=1 // pred_check
      _
    $region15: #{non_ar_net_forward.1} parent=1 // pred_check_branch
      %40 = sbr.rel (0) target = $region17
    $region16: #{non_ar_net_forward.1} parent=1 // pred_region
      %s42 = ssub.s32 1024, 1024
      %43 = vsyncadd [#allocation5], %s42
      %s44 = sshll.u32 [#allocation6], 4
      %s45 = int_to_ptr.vmem [resolvable:$true] %s44
      %50 = dma.hbm_to_vmem [thread:$0]  %s3, 1024, %s45, [#allocation5], 64, 64, 4
    $region17: #{non_ar_net_forward.1} parent=1 // pred_fallthru
      _
    // Predicated region
    $region18: #{non_ar_net_forward.1} parent=1 // pred_check
      _
    $region19: #{non_ar_net_forward.1} parent=1 // pred_check_branch
      %52 = sbr.rel (0) target = $region21
    $region20: #{non_ar_net_forward.1} parent=1 // pred_region
      _
    $region21: #{non_ar_net_forward.1} parent=1 // pred_fallthru
      _
    // Predicated region
    $region22: #{non_ar_net_forward.1} parent=1 // pred_check
      _
    $region23: #{non_ar_net_forward.1} parent=1 // pred_check_branch
      %54 = sbr.rel (0) target = $region25
    $region24: #{non_ar_net_forward.1} parent=1 // pred_region
      %s56 = ssub.s32 1024, 1024
      %57 = vsyncadd [#allocation8], %s56
      %s58 = sshll.u32 [#allocation7], 4
      %s59 = int_to_ptr.vmem [resolvable:$true] %s58
      %64 = dma.hbm_to_vmem [thread:$0]  %s5, 1024, %s59, [#allocation8], 64, 64, 4
    $region25: #{non_ar_net_forward.1} parent=1 // pred_fallthru
      _
    // Predicated region
    $region26: #{non_ar_net_forward.1} parent=1 // pred_check
      _
    $region27: #{non_ar_net_forward.1} parent=1 // pred_check_branch
      %66 = sbr.rel (0) target = $region29
    $region28: #{non_ar_net_forward.1} parent=1 // pred_region
      _
    $region29: #{non_ar_net_forward.1} parent=1 // pred_fallthru
      _
    // Predicated region
    $region30: #{non_ar_net_forward.1} parent=1 // pred_check
      _
    $region31: #{non_ar_net_forward.1} parent=1 // pred_check_branch
      %68 = sbr.rel (0) target = $region33
    $region32: #{non_ar_net_forward.1} parent=1 // pred_region
      %69 = dma.done [#allocation3], 256
    $region33: #{non_ar_net_forward.1} parent=1 // pred_fallthru
      _
    // Predicated region
    $region34: #{non_ar_net_forward.1} parent=1 // pred_check
      _
    $region35: #{non_ar_net_forward.1} parent=1 // pred_check_branch
      %71 = sbr.rel (0) target = $region37
    $region36: #{non_ar_net_forward.1} parent=1 // pred_region
      %72 = dma.done [#allocation5], 1600
    $region37: #{non_ar_net_forward.1} parent=1 // pred_fallthru
      _
    // Predicated region
    $region38: #{non_ar_net_forward.1} parent=1 // pred_check
      _
    $region39: #{non_ar_net_forward.1} parent=1 // pred_check_branch
      %74 = sbr.rel (0) target = $region41
    $region40: #{non_ar_net_forward.1} parent=1 // pred_region
      %75 = dma.done [#allocation5], 1024
    $region41: #{non_ar_net_forward.1} parent=1 // pred_fallthru
      _
    // Predicated region
    $region42: #{non_ar_net_forward.1} parent=1 // pred_check
      _
    $region43: #{non_ar_net_forward.1} parent=1 // pred_check_branch
      %77 = sbr.rel (0) target = $region45
    $region44: #{non_ar_net_forward.1} parent=1 // pred_region
      %78 = dma.done [#allocation8], 1024
    $region45: #{non_ar_net_forward.1} parent=1 // pred_fallthru
      _
    %v80 = vld [vmem:[#allocation2] sm:$0xff]
    %v81 = vld [vmem:[#allocation2 + $0x8] sm:$0xff]
    %v82 = vpack.c.bf16 %v80, %v80
    %v83 = vpack.c.bf16 %v81, %v81
    %v84 = vld [vmem:[#allocation4] sm:$0xf]
    %v85 = vld [vmem:[#allocation4 + $0x4] sm:$0xf]
    %v86 = vld [vmem:[#allocation4 + $0x8] sm:$0xf]
    %v87 = vld [vmem:[#allocation4 + $0xc] sm:$0xf]
    %v88 = vld [vmem:[#allocation4 + $0x10] sm:$0xf]
    %v89 = vld [vmem:[#allocation4 + $0x14] sm:$0xf]
    %v90 = vld [vmem:[#allocation4 + $0x18] sm:$0xf]
    %v91 = vld [vmem:[#allocation4 + $0x1c] sm:$0xf]
    %v92 = vld [vmem:[#allocation4 + $0x20] sm:$0xf]
    %v93 = vld [vmem:[#allocation4 + $0x24] sm:$0xf]
    %v94 = vld [vmem:[#allocation4 + $0x28] sm:$0xf]
    %v95 = vld [vmem:[#allocation4 + $0x2c] sm:$0xf]
    %v96 = vld [vmem:[#allocation4 + $0x30] sm:$0xf]
    %v97 = vld [vmem:[#allocation4 + $0x34] sm:$0xf]
    %v98 = vld [vmem:[#allocation4 + $0x38] sm:$0xf]
    %v99 = vld [vmem:[#allocation4 + $0x3c] sm:$0xf]
    %v100 = vld [vmem:[#allocation4 + $0x40] sm:$0xf]
    %v101 = vld [vmem:[#allocation4 + $0x44] sm:$0xf]
    %v102 = vld [vmem:[#allocation4 + $0x48] sm:$0xf]
    %v103 = vld [vmem:[#allocation4 + $0x4c] sm:$0xf]
    %v104 = vld [vmem:[#allocation4 + $0x50] sm:$0xf]
    %v105 = vld [vmem:[#allocation4 + $0x54] sm:$0xf]
    %v106 = vld [vmem:[#allocation4 + $0x58] sm:$0xf]
    %v107 = vld [vmem:[#allocation4 + $0x5c] sm:$0xf]
    %v108 = vld [vmem:[#allocation4 + $0x60] sm:$0xf]
    %v109 = vld [vmem:[%s2] sm:$0x1]
    %v111 = vlaneseq
    %v112 = vshrl.u32 %v111, 7
    %v113 = vsub.s32 0, %v112
    %v114 = vrot.slane %v109, %v113
    %v141 = vunpack.c.l.b16 %v84
    %v142 = vunpack.c.l.b16 %v85
    %v143 = vunpack.c.l.b16 %v86
    %v144 = vunpack.c.l.b16 %v87
    %v145 = vunpack.c.l.b16 %v88
    %v146 = vunpack.c.l.b16 %v89
    %v147 = vunpack.c.l.b16 %v90
    %v148 = vunpack.c.l.b16 %v91
    %v149 = vunpack.c.l.b16 %v92
    %v150 = vunpack.c.l.b16 %v93
    %v151 = vunpack.c.l.b16 %v94
    %v152 = vunpack.c.l.b16 %v95
    %v153 = vunpack.c.l.b16 %v96
    %v154 = vunpack.c.l.b16 %v97
    %v155 = vunpack.c.l.b16 %v98
    %v156 = vunpack.c.l.b16 %v99
    %v157 = vunpack.c.l.b16 %v100
    %v158 = vunpack.c.l.b16 %v101
    %v159 = vunpack.c.l.b16 %v102
    %v160 = vunpack.c.l.b16 %v103
    %v161 = vunpack.c.l.b16 %v104
    %v162 = vunpack.c.l.b16 %v105
    %v163 = vunpack.c.l.b16 %v106
    %v164 = vunpack.c.l.b16 %v107
    %v165 = vunpack.c.l.b16 %v108
    %v166 = vpack.c.b16 %v142, %v141
    %v167 = vpack.c.b16 %v144, %v143
    %v168 = vpack.c.b16 %v146, %v145
    %v169 = vpack.c.b16 %v148, %v147
    %v170 = vpack.c.b16 %v150, %v149
    %v171 = vpack.c.b16 %v152, %v151
    %v172 = vpack.c.b16 %v154, %v153
    %v173 = vpack.c.b16 %v156, %v155
    %v174 = vpack.c.b16 %v158, %v157
    %v175 = vpack.c.b16 %v160, %v159
    %v176 = vpack.c.b16 %v162, %v161
    %v177 = vpack.c.b16 %v164, %v163
    %v178 = vpack.c.b16 %v165, %v165
    %vm191 = vcmask 588800
    %v193 = vsel %vm191, %v83, 0
    %vm195 = vcmask 1043456
    %v197 = vsel %vm195, %v178, 0
    %199 = vmatprep.subr.bf16.mxu0 0
    %200 = vmatpush1.bf16.msra.mxu0 %v166
    %201 = vmatprep.subr.bf16.mxu0 0
    %202 = vmatpush1.bf16.msra.mxu0 %v167
    %203 = vmatprep.subr.bf16.mxu0 0
    %204 = vmatpush1.bf16.msra.mxu0 %v168
    %205 = vmatprep.subr.bf16.mxu0 0
    %206 = vmatpush1.bf16.msra.mxu0 %v169
    %207 = vmatprep.subr.bf16.mxu0 0
    %208 = vmatpush1.bf16.msra.mxu0 %v170
    %209 = vmatprep.subr.bf16.mxu0 0
    %210 = vmatpush1.bf16.msra.mxu0 %v171
    %211 = vmatprep.subr.bf16.mxu0 0
    %212 = vmatpush1.bf16.msra.mxu0 %v172
    %213 = vmatprep.subr.bf16.mxu0 0
    %214 = vmatpush1.bf16.msra.mxu0 %v173
    %215 = vmatprep.subr.bf16.mxu0 0
    %216 = vmatpush1.bf16.msra.mxu0 %v174
    %217 = vmatprep.subr.bf16.mxu0 0
    %218 = vmatpush1.bf16.msra.mxu0 %v175
    %219 = vmatprep.subr.bf16.mxu0 0
    %220 = vmatpush1.bf16.msra.mxu0 %v176
    %221 = vmatprep.subr.bf16.mxu0 0
    %222 = vmatpush1.bf16.msra.mxu0 %v177
    %223 = vmatprep.subr.bf16.mxu0 0
    %224 = vmatpush1.bf16.msra.mxu0 %v197
    %225 = vmatprep.subr.bf16.mxu0 0
    %226 = vmatpush1.bf16.msra.mxu0 0
    %227 = vmatprep.subr.bf16.mxu0 0
    %228 = vmatpush1.bf16.msra.mxu0 0
    %229 = vmatprep.subr.bf16.mxu0 0
    %230 = vmatpush1.bf16.msra.mxu0 0
    %231 = vmatprep.mubr.bf16.mxu0 %v193
    %232 = vmatmul.mubr.bf16.gmra.mrb[0].mxu0 %v82
    %v233 = vpop.f32.mrb[0].mxu0
    %v234 = vadd.f32 %v114, %v233
    %v235 = vpop.f32.mrb[0].mxu0
    %v236 = vpop.f32.mrb[0].mxu0
    %v237 = vpop.f32.mrb[0].mxu0
    %238 = vdwg.mxu0
    %v239 = vmax.f32 %v234, 0.0
    %v240 = vpack.c.bf16 %v239, %v239
    %v241 = vld [vmem:[#allocation6] sm:$0xf]
    %v242 = vld [vmem:[#allocation6 + $0x4] sm:$0xf]
    %v243 = vld [vmem:[#allocation6 + $0x8] sm:$0xf]
    %v244 = vld [vmem:[#allocation6 + $0xc] sm:$0xf]
    %v245 = vld [vmem:[#allocation6 + $0x10] sm:$0xf]
    %v246 = vld [vmem:[#allocation6 + $0x14] sm:$0xf]
    %v247 = vld [vmem:[#allocation6 + $0x18] sm:$0xf]
    %v248 = vld [vmem:[#allocation6 + $0x1c] sm:$0xf]
    %v249 = vld [vmem:[#allocation6 + $0x20] sm:$0xf]
    %v250 = vld [vmem:[#allocation6 + $0x24] sm:$0xf]
    %v251 = vld [vmem:[#allocation6 + $0x28] sm:$0xf]
    %v252 = vld [vmem:[#allocation6 + $0x2c] sm:$0xf]
    %v253 = vld [vmem:[#allocation6 + $0x30] sm:$0xf]
    %v254 = vld [vmem:[#allocation6 + $0x34] sm:$0xf]
    %v255 = vld [vmem:[#allocation6 + $0x38] sm:$0xf]
    %v256 = vld [vmem:[#allocation6 + $0x3c] sm:$0xf]
    %v257 = vld [vmem:[%s4] sm:$0x1]
    %v259 = vlaneseq
    %v260 = vshrl.u32 %v259, 7
    %v261 = vsub.s32 0, %v260
    %v262 = vrot.slane %v257, %v261
    %v280 = vunpack.c.l.b16 %v241
    %v281 = vunpack.c.l.b16 %v242
    %v282 = vunpack.c.l.b16 %v243
    %v283 = vunpack.c.l.b16 %v244
    %v284 = vunpack.c.l.b16 %v245
    %v285 = vunpack.c.l.b16 %v246
    %v286 = vunpack.c.l.b16 %v247
    %v287 = vunpack.c.l.b16 %v248
    %v288 = vunpack.c.l.b16 %v249
    %v289 = vunpack.c.l.b16 %v250
    %v290 = vunpack.c.l.b16 %v251
    %v291 = vunpack.c.l.b16 %v252
    %v292 = vunpack.c.l.b16 %v253
    %v293 = vunpack.c.l.b16 %v254
    %v294 = vunpack.c.l.b16 %v255
    %v295 = vunpack.c.l.b16 %v256
    %v296 = vpack.c.b16 %v281, %v280
    %v297 = vpack.c.b16 %v283, %v282
    %v298 = vpack.c.b16 %v285, %v284
    %v299 = vpack.c.b16 %v287, %v286
    %v300 = vpack.c.b16 %v289, %v288
    %v301 = vpack.c.b16 %v291, %v290
    %v302 = vpack.c.b16 %v293, %v292
    %v303 = vpack.c.b16 %v295, %v294
    %312 = vmatprep.subr.bf16.mxu0 0
    %313 = vmatpush1.bf16.msra.mxu0 %v296
    %314 = vmatprep.subr.bf16.mxu0 0
    %315 = vmatpush1.bf16.msra.mxu0 %v297
    %316 = vmatprep.subr.bf16.mxu0 0
    %317 = vmatpush1.bf16.msra.mxu0 %v298
    %318 = vmatprep.subr.bf16.mxu0 0
    %319 = vmatpush1.bf16.msra.mxu0 %v299
    %320 = vmatprep.subr.bf16.mxu0 0
    %321 = vmatpush1.bf16.msra.mxu0 %v300
    %322 = vmatprep.subr.bf16.mxu0 0
    %323 = vmatpush1.bf16.msra.mxu0 %v301
    %324 = vmatprep.subr.bf16.mxu0 0
    %325 = vmatpush1.bf16.msra.mxu0 %v302
    %326 = vmatprep.subr.bf16.mxu0 0
    %327 = vmatpush1.bf16.msra.mxu0 %v303
    %328 = vmatprep.subr.bf16.mxu0 0
    %329 = vmatpush1.bf16.msra.mxu0 0
    %330 = vmatprep.subr.bf16.mxu0 0
    %331 = vmatpush1.bf16.msra.mxu0 0
    %332 = vmatprep.subr.bf16.mxu0 0
    %333 = vmatpush1.bf16.msra.mxu0 0
    %334 = vmatprep.subr.bf16.mxu0 0
    %335 = vmatpush1.bf16.msra.mxu0 0
    %336 = vmatprep.subr.bf16.mxu0 0
    %337 = vmatpush1.bf16.msra.mxu0 0
    %338 = vmatprep.subr.bf16.mxu0 0
    %339 = vmatpush1.bf16.msra.mxu0 0
    %340 = vmatprep.subr.bf16.mxu0 0
    %341 = vmatpush1.bf16.msra.mxu0 0
    %342 = vmatprep.subr.bf16.mxu0 0
    %343 = vmatpush1.bf16.msra.mxu0 0
    %344 = vmatprep.mubr.bf16.mxu0 0
    %345 = vmatmul.mubr.bf16.gmra.mrb[0].mxu0 %v240
    %v346 = vpop.f32.mrb[0].mxu0
    %v347 = vadd.f32 %v262, %v346
    %v348 = vpop.f32.mrb[0].mxu0
    %v349 = vpop.f32.mrb[0].mxu0
    %v350 = vpop.f32.mrb[0].mxu0
    %351 = vdwg.mxu0
    %v352 = vmax.f32 %v347, 0.0
    %v353 = vpack.c.bf16 %v352, %v352
    %v354 = vld [vmem:[#allocation7] sm:$0xf]
    %v355 = vld [vmem:[#allocation7 + $0x4] sm:$0xf]
    %v356 = vld [vmem:[#allocation7 + $0x8] sm:$0xf]
    %v357 = vld [vmem:[#allocation7 + $0xc] sm:$0xf]
    %v358 = vld [vmem:[#allocation7 + $0x10] sm:$0xf]
    %v359 = vld [vmem:[#allocation7 + $0x14] sm:$0xf]
    %v360 = vld [vmem:[#allocation7 + $0x18] sm:$0xf]
    %v361 = vld [vmem:[#allocation7 + $0x1c] sm:$0xf]
    %v362 = vld [vmem:[#allocation7 + $0x20] sm:$0xf]
    %v363 = vld [vmem:[#allocation7 + $0x24] sm:$0xf]
    %v364 = vld [vmem:[#allocation7 + $0x28] sm:$0xf]
    %v365 = vld [vmem:[#allocation7 + $0x2c] sm:$0xf]
    %v366 = vld [vmem:[#allocation7 + $0x30] sm:$0xf]
    %v367 = vld [vmem:[#allocation7 + $0x34] sm:$0xf]
    %v368 = vld [vmem:[#allocation7 + $0x38] sm:$0xf]
    %v369 = vld [vmem:[#allocation7 + $0x3c] sm:$0xf]
    %v370 = vld [vmem:[%s6] sm:$0x1]
    %v372 = vlaneseq
    %v373 = vshrl.u32 %v372, 7
    %v374 = vsub.s32 0, %v373
    %v375 = vrot.slane %v370, %v374
    %v393 = vunpack.c.l.b16 %v354
    %v394 = vunpack.c.l.b16 %v355
    %v395 = vunpack.c.l.b16 %v356
    %v396 = vunpack.c.l.b16 %v357
    %v397 = vunpack.c.l.b16 %v358
    %v398 = vunpack.c.l.b16 %v359
    %v399 = vunpack.c.l.b16 %v360
    %v400 = vunpack.c.l.b16 %v361
    %v401 = vunpack.c.l.b16 %v362
    %v402 = vunpack.c.l.b16 %v363
    %v403 = vunpack.c.l.b16 %v364
    %v404 = vunpack.c.l.b16 %v365
    %v405 = vunpack.c.l.b16 %v366
    %v406 = vunpack.c.l.b16 %v367
    %v407 = vunpack.c.l.b16 %v368
    %v408 = vunpack.c.l.b16 %v369
    %v409 = vpack.c.b16 %v394, %v393
    %v410 = vpack.c.b16 %v396, %v395
    %v411 = vpack.c.b16 %v398, %v397
    %v412 = vpack.c.b16 %v400, %v399
    %v413 = vpack.c.b16 %v402, %v401
    %v414 = vpack.c.b16 %v404, %v403
    %v415 = vpack.c.b16 %v406, %v405
    %v416 = vpack.c.b16 %v408, %v407
    %425 = vmatprep.subr.bf16.mxu0 0
    %426 = vmatpush1.bf16.msra.mxu0 %v409
    %427 = vmatprep.subr.bf16.mxu0 0
    %428 = vmatpush1.bf16.msra.mxu0 %v410
    %429 = vmatprep.subr.bf16.mxu0 0
    %430 = vmatpush1.bf16.msra.mxu0 %v411
    %431 = vmatprep.subr.bf16.mxu0 0
    %432 = vmatpush1.bf16.msra.mxu0 %v412
    %433 = vmatprep.subr.bf16.mxu0 0
    %434 = vmatpush1.bf16.msra.mxu0 %v413
    %435 = vmatprep.subr.bf16.mxu0 0
    %436 = vmatpush1.bf16.msra.mxu0 %v414
    %437 = vmatprep.subr.bf16.mxu0 0
    %438 = vmatpush1.bf16.msra.mxu0 %v415
    %439 = vmatprep.subr.bf16.mxu0 0
    %440 = vmatpush1.bf16.msra.mxu0 %v416
    %441 = vmatprep.subr.bf16.mxu0 0
    %442 = vmatpush1.bf16.msra.mxu0 0
    %443 = vmatprep.subr.bf16.mxu0 0
    %444 = vmatpush1.bf16.msra.mxu0 0
    %445 = vmatprep.subr.bf16.mxu0 0
    %446 = vmatpush1.bf16.msra.mxu0 0
    %447 = vmatprep.subr.bf16.mxu0 0
    %448 = vmatpush1.bf16.msra.mxu0 0
    %449 = vmatprep.subr.bf16.mxu0 0
    %450 = vmatpush1.bf16.msra.mxu0 0
    %451 = vmatprep.subr.bf16.mxu0 0
    %452 = vmatpush1.bf16.msra.mxu0 0
    %453 = vmatprep.subr.bf16.mxu0 0
    %454 = vmatpush1.bf16.msra.mxu0 0
    %455 = vmatprep.subr.bf16.mxu0 0
    %456 = vmatpush1.bf16.msra.mxu0 0
    %457 = vmatprep.mubr.bf16.mxu0 0
    %458 = vmatmul.mubr.bf16.gmra.mrb[0].mxu0 %v353
    %v459 = vpop.f32.mrb[0].mxu0
    %v460 = vadd.f32 %v375, %v459
    %v461 = vpop.f32.mrb[0].mxu0
    %v462 = vpop.f32.mrb[0].mxu0
    %v463 = vpop.f32.mrb[0].mxu0
    %464 = vdwg.mxu0
    %v465 = vpack.c.bf16 %v460, %v460
    %466 = vst [vmem:[%s7] sm:$0xf] %v465
    // Predicated region
    $region46: #{non_ar_net_forward.1} parent=1 // pred_check
      _
    $region47: #{non_ar_net_forward.1} parent=1 // pred_check_branch
      %468 = sbr.rel (0) target = $region49
    $region48: #{non_ar_net_forward.1} parent=1 // pred_region
      _
    $region49: #{non_ar_net_forward.1} parent=1 // pred_fallthru
      _
    // Predicated region
    $region50: #{non_ar_net_forward.1} parent=1 // pred_check
      _
    $region51: #{non_ar_net_forward.1} parent=1 // pred_check_branch
      %470 = sbr.rel (0) target = $region53
    $region52: #{non_ar_net_forward.1} parent=1 // pred_region
      _
    $region53: #{non_ar_net_forward.1} parent=1 // pred_fallthru
      _
    %471 = vsyncpa [#allocation3], 1
    %472 = vsyncpa [#allocation5], 1
    %473 = vsyncpa [#allocation8], 1

</llo_original>
